<compile_context>
chip_gen: v7x
topology: tpu7x:2x2x1
jax: 0.10.0
libtpu: 0.0.40
codegen_flags: <defaults>
</compile_context>

<pallas_src>
import functools

import jax
import jax.numpy as jnp
from jax.experimental import pallas as pl
from jax.experimental.pallas import tpu as pltpu


# --------------------------------------------------------------------------
# Kernels
# --------------------------------------------------------------------------
def _layernorm_kernel(alpha_ref, beta_ref, x_ref, o_ref, *, eps):
    """Generic path: one logical row per vector row; hidden on the lane axis."""
    x = x_ref[...]
    xf = x.astype(jnp.float32)
    # The source module computes both "mean" and "std" with .mean(dim=-1):
    # compute the cross-lane reduction once and reuse it.
    mean = jnp.mean(xf, axis=-1, keepdims=True)           # (row_tile, 1)
    inv = pl.reciprocal(mean + eps, approx=False)         # exact per-row 1/(mean+eps)
    alpha = alpha_ref[0].astype(jnp.float32)
    beta = beta_ref[0].astype(jnp.float32)
    if x.dtype == jnp.float32:
        out = alpha * (xf - mean) * inv + beta
    else:
        # Keep the tile in its native dtype (bf16 VALU on v6e/v7x): fold the
        # normalization into a per-row scale/shift (output precision is the
        # native dtype anyway).
        scale = (alpha * inv).astype(x.dtype)              # (row_tile, 1)
        shift = (beta - alpha * mean * inv).astype(x.dtype)
        out = x * scale + shift
    o_ref[...] = out.astype(o_ref.dtype)


def _layernorm_packed_kernel(alpha_ref, beta_ref, m_ref, x_ref, o_ref, *, eps):
    """Lane-dense path: each 128-lane row packs 128/hidden logical rows."""
    x = x_ref[...]
    # Per-segment mean, already broadcast to every lane of its segment, via one
    # MXU matmul against the resident block-diagonal (1/hidden) matrix.
    mean = jnp.dot(
        x, m_ref[...],
        preferred_element_type=jnp.float32,
        precision=jax.lax.Precision.HIGHEST,
    )                                                      # (row_tile, 128) f32
    inv = pl.reciprocal(mean + eps, approx=False)
    alpha = alpha_ref[0].astype(jnp.float32)
    beta = beta_ref[0].astype(jnp.float32)
    if x.dtype == jnp.float32:
        out = alpha * (x - mean) * inv + beta
    else:
        # Native-dtype affine (no full-tile f32 staging copy).
        scale = (alpha * inv).astype(x.dtype)
        shift = (beta - alpha * mean * inv).astype(x.dtype)
        out = x * scale + shift
    o_ref[...] = out.astype(o_ref.dtype)


# --------------------------------------------------------------------------
# Tiling / hardware heuristics
# --------------------------------------------------------------------------
def _hw_params():
    """Return (scoped_vmem_limit_bytes, per_block_target_bytes, multi_tensorcore)."""
    mib = 1024 * 1024
    try:
        vmem_cap = int(pltpu.get_tpu_info().vmem_capacity_bytes)
    except Exception:
        vmem_cap = 64 * mib          # conservative fallback: v7x per-TC VMEM
    try:
        kind = jax.devices()[0].device_kind.lower()
        multi_tc = ("v7" in kind) or ("7x" in kind)
    except Exception:
        multi_tc = vmem_cap <= 64 * mib
    # Scoped VMEM limit: ~96 MiB on 128-MiB parts (v5e default scoped limit is
    # only 16 MiB, so the explicit limit is mandatory there), ~48 MiB on v7x.
    scoped = max(32 * mib, min(96 * mib, (vmem_cap * 3) // 4))
    # Per-block budget: 2x in + 2x out (double-buffered) + f32 compute temps
    # ~= 6 f32-sized blocks.  Never regress below ~4 MiB blocks.
    block_target = max(4 * mib, scoped // 6)
    return scoped, block_target, multi_tc


def _sublane(dtype):
    # Sublane packing granularity: 8 rows (4-byte), 16 (2-byte), 32 (1-byte).
    return max(8, 32 // max(1, jnp.dtype(dtype).itemsize))


def _pick_row_tile(rows, width, dtype, block_target_bytes, multi_tc):
    """Largest row block fitting the per-block budget (f32 accounting).

    No artificial row cap; >= 4 grid steps only on multi-TensorCore parts so
    each core keeps >= 2 pipelined steps.
    """
    sub = _sublane(dtype)
    if rows <= sub:
        return int(rows)                        # single full-extent block
    per_row_f32 = width * 4                     # budget with the f32 compute footprint
    by_vmem = max(sub, (block_target_bytes // per_row_f32) // sub * sub)
    tile = min(by_vmem, (rows // sub) * sub)
    if multi_tc:
        by_cores = max(sub, (rows // 4) // sub * sub)
        tile = min(tile, by_cores)
    return int(max(sub, tile))


def _segment_mean_matrix(hidden, dtype):
    """(128,128) block-diagonal matrix: 1/hidden inside each hidden x hidden block."""
    group = 128 // hidden
    m = jnp.kron(
        jnp.eye(group, dtype=jnp.float32),
        jnp.full((hidden, hidden), 1.0 / hidden, dtype=jnp.float32),
    )
    return m.astype(dtype)


# --------------------------------------------------------------------------
# Wrapper
# --------------------------------------------------------------------------
def layer_normalization(x, alpha, beta, eps=1e-6, row_tile=None):
    """x: (..., hidden). alpha, beta: shape (1,) learnable scalars."""
    orig_shape = x.shape
    hidden = orig_shape[-1]
    x2d = x.reshape(-1, hidden)
    rows = x2d.shape[0]

    vmem_limit, block_target, multi_tc = _hw_params()

    # Lane-dense repack: hidden < 128 would otherwise use a fraction of the
    # 128 lanes and every store would be a masked vst.  Pack 128/hidden logical
    # rows per vector row when shapes allow (contiguous reshape, no padding).
    packed = (
        hidden < 128
        and 128 % hidden == 0
        and (rows * hidden) % 128 == 0
        and rows * hidden >= 128
    )

    if packed:
        group = 128 // hidden
        xw = x2d.reshape(rows // group, 128)     # contiguous regroup (bitcast-able)
        m_dtype = jnp.bfloat16 if x2d.dtype == jnp.dtype(jnp.bfloat16) else jnp.float32
        seg_mat = _segment_mean_matrix(hidden, m_dtype)
        kernel = functools.partial(_layernorm_packed_kernel, eps=float(eps))
        extra_in = [seg_mat]
        extra_specs = [pl.BlockSpec((128, 128), lambda i: (0, 0))]  # resident block
    else:
        xw = x2d
        kernel = functools.partial(_layernorm_kernel, eps=float(eps))
        extra_in = []
        extra_specs = []

    w_rows, width = xw.shape
    sub = _sublane(xw.dtype)

    # Guard very wide rows: one sublane-packed row group (double-buffered, plus
    # f32 temps) must fit the scoped VMEM budget.
    # TODO(synk): add a hidden-axis ("arbitrary") tiling path with a running
    # row-sum for hidden dims too wide for a single block.
    if 6 * sub * width * 4 > vmem_limit:
        raise NotImplementedError(
            f"hidden={hidden} too wide for single-block row normalization")

    if row_tile is None:
        row_tile = _pick_row_tile(w_rows, width, xw.dtype, block_target, multi_tc)

    grid = (pl.cdiv(w_rows, row_tile),)

    out = pl.pallas_call(
        kernel,
        out_shape=jax.ShapeDtypeStruct((w_rows, width), x.dtype),
        grid=grid,
        in_specs=[
            pl.BlockSpec(memory_space=pltpu.MemorySpace.SMEM),   # alpha
            pl.BlockSpec(memory_space=pltpu.MemorySpace.SMEM),   # beta
            *extra_specs,                                        # (packed) 1/h matrix
            pl.BlockSpec((row_tile, width), lambda i: (i, 0)),   # x
        ],
        out_specs=pl.BlockSpec((row_tile, width), lambda i: (i, 0)),
        compiler_params=pltpu.CompilerParams(
            dimension_semantics=("parallel",),
            vmem_limit_bytes=int(vmem_limit),
        ),
    )(alpha, beta, *extra_in, xw)

    return out.reshape(orig_shape)


def layer_normalization_ref(x, alpha, beta, eps=1e-6):
    mean = jnp.mean(x, axis=-1, keepdims=True)
    std = jnp.mean(x, axis=-1, keepdims=True)   # faithful to the source module
    return alpha * (x - mean) / (std + eps) + beta


if __name__ == "__main__":
    # Deterministic parameter init matching nn.Parameter(torch.ones(1)/zeros(1)).
    alpha = jnp.ones((1,), dtype=jnp.float32)
    beta = jnp.zeros((1,), dtype=jnp.float32)
    eps = 1e-6

    # Case 1: (batch, seq, hidden) with hidden=32 -> exercises the lane-dense
    # packed path (rows*hidden divisible by 128, 128 % hidden == 0).
    key = jax.random.PRNGKey(0)
    x = jax.random.normal(key, (2, 8, 32), dtype=jnp.float32)
    out = jax.block_until_ready(layer_normalization(x, alpha, beta, eps=eps))
    ref = layer_normalization_ref(x, alpha, beta, eps=eps)
    assert out.shape == x.shape
    assert jnp.allclose(out, ref, atol=1e-5, rtol=1e-5), "mismatch vs reference (packed path)"

    # Case 2: rows*hidden not a multiple of 128 -> generic (row_tile, hidden)
    # path with a cdiv grid and masked partial last block.
    x2 = jax.random.normal(jax.random.PRNGKey(0), (3, 5, 32), dtype=jnp.float32)
    out2 = jax.block_until_ready(layer_normalization(x2, alpha, beta, eps=eps))
    ref2 = layer_normalization_ref(x2, alpha, beta, eps=eps)
    assert out2.shape == x2.shape
    assert jnp.allclose(out2, ref2, atol=1e-5, rtol=1e-5), "mismatch vs reference (generic path)"

    print("KERNEL_OK")
</pallas_src>

<mosaic_0001>
module attributes {stable_mosaic.version = 11 : i64} {
  func.func @_layernorm_packed_kernel(%arg0: i32, %arg1: memref<1xf32, #tpu.memory_space<smem>>, %arg2: memref<1xf32, #tpu.memory_space<smem>>, %arg3: memref<128x128xf32, #tpu.memory_space<vmem>>, %arg4: memref<4x128xf32, #tpu.memory_space<vmem>>, %arg5: memref<4x128xf32, #tpu.memory_space<vmem>>) attributes {dimension_semantics = [#tpu.dimension_semantics<parallel>], iteration_bounds = array<i64: 1>, scalar_prefetch = 0 : i64, scratch_operands = 0 : i64, tpu.core_type = #tpu.core_type<tc>, window_params = [{transform_indices = @transform_0, window_bounds = array<i64: 1>}, {transform_indices = @transform_1, window_bounds = array<i64: 1>}, {pipeline_mode = #tpu.pipeline_mode<synchronous>, transform_indices = @transform_2, window_bounds = array<i64: 128, 128>}, {transform_indices = @transform_3, window_bounds = array<i64: 4, 128>}, {transform_indices = @transform_4, window_bounds = array<i64: 4, 128>}]} {
    %c0 = arith.constant 0 : index
    %c0_0 = arith.constant 0 : index
    %0 = vector.load %arg4[%c0, %c0_0] : memref<4x128xf32, #tpu.memory_space<vmem>>, vector<4x128xf32>
    %c0_1 = arith.constant 0 : index
    %c0_2 = arith.constant 0 : index
    %1 = vector.load %arg3[%c0_1, %c0_2] : memref<128x128xf32, #tpu.memory_space<vmem>>, vector<128x128xf32>
    %cst = arith.constant dense<0.000000e+00> : vector<4x128xf32>
    %2 = tpu.matmul %0, %1, %cst {dimension_numbers = #tpu.dot_dimension_numbers<[1], [0], [0], [1], [0, 0, 1, 1], [], []>, precision = #tpu.contract_precision<fp32>} : vector<4x128xf32>, vector<128x128xf32>, vector<4x128xf32> -> vector<4x128xf32>
    %cst_3 = arith.constant 9.99999997E-7 : f32
    %3 = vector.broadcast %cst_3 : f32 to vector<4x128xf32>
    %4 = arith.addf %2, %3 : vector<4x128xf32>
    %5 = tpu.reciprocal %4 : vector<4x128xf32> -> vector<4x128xf32>
    %c0_4 = arith.constant 0 : index
    %6 = memref.load %arg1[%c0_4] : memref<1xf32, #tpu.memory_space<smem>>
    %c0_5 = arith.constant 0 : index
    %7 = memref.load %arg2[%c0_5] : memref<1xf32, #tpu.memory_space<smem>>
    %8 = arith.subf %0, %2 : vector<4x128xf32>
    %9 = vector.broadcast %6 : f32 to vector<4x128xf32>
    %10 = arith.mulf %9, %8 : vector<4x128xf32>
    %11 = arith.mulf %10, %5 : vector<4x128xf32>
    %12 = vector.broadcast %7 : f32 to vector<4x128xf32>
    %13 = arith.addf %11, %12 : vector<4x128xf32>
    %c0_6 = arith.constant 0 : index
    %c0_7 = arith.constant 0 : index
    %14 = vector.load %arg5[%c0_6, %c0_7] : memref<4x128xf32, #tpu.memory_space<vmem>>, vector<4x128xf32>
    tpu.vector_store %arg5[%c0_6, %c0_7], %13 {strides = array<i32>} : memref<4x128xf32, #tpu.memory_space<vmem>>, vector<4x128xf32>,
    return
  }
  func.func @transform_0(%arg0: i32) -> i32 {
    %c0_i32 = arith.constant 0 : i32
    %c0_i32_0 = arith.constant 0 : i32
    return %c0_i32 : i32
  }
  func.func @transform_1(%arg0: i32) -> i32 {
    %c0_i32 = arith.constant 0 : i32
    %c0_i32_0 = arith.constant 0 : i32
    return %c0_i32 : i32
  }
  func.func @transform_2(%arg0: i32) -> (i32, i32) {
    %c0_i32 = arith.constant 0 : i32
    %c0_i32_0 = arith.constant 0 : i32
    %c0_i32_1 = arith.constant 0 : i32
    return %c0_i32, %c0_i32_0 : i32, i32
  }
  func.func @transform_3(%arg0: i32) -> (i32, i32) {
    %c0_i32 = arith.constant 0 : i32
    %c0_i32_0 = arith.constant 0 : i32
    return %arg0, %c0_i32 : i32, i32
  }
  func.func @transform_4(%arg0: i32) -> (i32, i32) {
    %c0_i32 = arith.constant 0 : i32
    %c0_i32_0 = arith.constant 0 : i32
    return %arg0, %c0_i32 : i32, i32
  }
}

</mosaic_0001>

<llo_original>
// kernel: tpu_custom_call.1
$region0: #{tpu_custom_call.1}
  #allocation0 [shape = 'u32[]', space=smem, size = 0x4, offset = 0x4, fixed_abs, tag = 'smem constant byte address 0x4 - core index']
  #allocation1 [shape = 'u32[144,128]{1,0:T(1,128)}', space=vmem, size = 0x12000, scoped, tag = 'internal scratch']
  #allocation2 [shape = 'f32[1]{0:T(128)S(6)}', space=smem, size = 0x200, scoped, tag = 'scoped memory for tpu_custom_call.1']
  #allocation3 [shape = 'f32[1]{0:T(128)S(6)}', space=smem, size = 0x200, scoped, tag = 'scoped memory for tpu_custom_call.1']
  %s0 = inlined_call_operand.<no memory space> [shape: f32[1], index: 0, kind: input, shape index: {}]
  %s1 = inlined_call_operand.<no memory space> [shape: f32[1], index: 1, kind: input, shape index: {}]
  %s2 = inlined_call_operand.hbm [shape: f32[128,128], index: 2, kind: input, shape index: {}]
  %s3 = inlined_call_operand.vmem [shape: f32[4,128], index: 3, kind: input, shape index: {}]
  %s4 = inlined_call_operand.hbm [shape: f32[4,128], index: 4, kind: output, shape index: {}]
  %s5 = sld [smem:[#allocation0]]
  $region30: #{tpu_custom_call.1} parent=0
    _
  %s7 = ssub.s32 1, %s5
  %s8 = scalar_select 0, %s7, %s5
  %9 = sst [smem:[#allocation2]] %s0
  %10 = sst [smem:[#allocation3]] %s1
  $region1: #{tpu_custom_call.1} parent=0
    #allocation4 [shape = 'u8[65536]{0}', space=vmem, size = 0x10000, scoped, tag = 'input window, operand 2, single buffered']
    #allocation5 [shape = 's32[1]{0}', space=sflag, size = 0x4, scoped, tag = 'scoped memory for tpu_custom_call.1']
    #allocation6 [shape = 's32[1]{0}', space=sflag, size = 0x4, scoped, tag = 'scoped memory for tpu_custom_call.1']
    #allocation7 [shape = 'u8[2048]{0}', space=vmem, size = 0x800, scoped, tag = 'output window, operand 0, single buffered']
    %11 = vsyncpa [#allocation5], 0
    %12 = vsyncpa [#allocation6], 0
    // Predicated region
    $region2: #{tpu_custom_call.1} parent=1 // pred_check
      _
    $region3: #{tpu_custom_call.1} parent=1 // pred_check_branch
      %14 = sbr.rel (0) target = $region5
    $region4: #{tpu_custom_call.1} parent=1 // pred_region
      _
    $region5: #{tpu_custom_call.1} parent=1 // pred_fallthru
      _
    // Predicated region
    $region6: #{tpu_custom_call.1} parent=1 // pred_check
      _
    $region7: #{tpu_custom_call.1} parent=1 // pred_check_branch
      %16 = sbr.rel (0) target = $region9
    $region8: #{tpu_custom_call.1} parent=1 // pred_region
      _
    $region9: #{tpu_custom_call.1} parent=1 // pred_fallthru
      _
    // Predicated region
    $region10: #{tpu_custom_call.1} parent=1 // pred_check
      _
    $region11: #{tpu_custom_call.1} parent=1 // pred_check_branch
      %18 = sbr.rel (0) target = $region13
    $region12: #{tpu_custom_call.1} parent=1 // pred_region
      %s20 = ssub.s32 2048, 2048
      %21 = vsyncadd [#allocation5], %s20
      %s22 = sshll.u32 [#allocation4], 4
      %s23 = int_to_ptr.vmem [resolvable:$true] %s22
      %28 = dma.hbm_to_vmem [thread:$0]  %s2, 2048, %s23, [#allocation5], 128, 128, 8
    $region13: #{tpu_custom_call.1} parent=1 // pred_fallthru
      _
    // Predicated region
    $region14: #{tpu_custom_call.1} parent=1 // pred_check
      _
    $region15: #{tpu_custom_call.1} parent=1 // pred_check_branch
      %30 = sbr.rel (0) target = $region17
    $region16: #{tpu_custom_call.1} parent=1 // pred_region
      _
    $region17: #{tpu_custom_call.1} parent=1 // pred_fallthru
      _
    // Predicated region
    $region18: #{tpu_custom_call.1} parent=1 // pred_check
      _
    $region19: #{tpu_custom_call.1} parent=1 // pred_check_branch
      %32 = sbr.rel (0) target = $region21
    $region20: #{tpu_custom_call.1} parent=1 // pred_region
      %33 = dma.done [#allocation5], 2048
    $region21: #{tpu_custom_call.1} parent=1 // pred_fallthru
      _
    %v34 = vld [vmem:[%s3] sm:$0xf]
    %v35 = vld [vmem:[#allocation4] sm:$0xff]
    %v36 = vld [vmem:[#allocation4 + $0x8] sm:$0xff]
    %v37 = vld [vmem:[#allocation4 + $0x10] sm:$0xff]
    %v38 = vld [vmem:[#allocation4 + $0x18] sm:$0xff]
    %v39 = vld [vmem:[#allocation4 + $0x20] sm:$0xff]
    %v40 = vld [vmem:[#allocation4 + $0x28] sm:$0xff]
    %v41 = vld [vmem:[#allocation4 + $0x30] sm:$0xff]
    %v42 = vld [vmem:[#allocation4 + $0x38] sm:$0xff]
    %v43 = vld [vmem:[#allocation4 + $0x40] sm:$0xff]
    %v44 = vld [vmem:[#allocation4 + $0x48] sm:$0xff]
    %v45 = vld [vmem:[#allocation4 + $0x50] sm:$0xff]
    %v46 = vld [vmem:[#allocation4 + $0x58] sm:$0xff]
    %v47 = vld [vmem:[#allocation4 + $0x60] sm:$0xff]
    %v48 = vld [vmem:[#allocation4 + $0x68] sm:$0xff]
    %v49 = vld [vmem:[#allocation4 + $0x70] sm:$0xff]
    %v50 = vld [vmem:[#allocation4 + $0x78] sm:$0xff]
    %51 = vmatprep.subr.mxu0 0.0
    %v52 = vand.u32 %v35, 4294901760
    %53 = vmatpush1.msra.mxu0 %v52
    %54 = vmatprep.subr.mxu0 0.0
    %v55 = vand.u32 %v36, 4294901760
    %56 = vmatpush1.msra.mxu0 %v55
    %57 = vmatprep.subr.mxu0 0.0
    %v58 = vand.u32 %v37, 4294901760
    %59 = vmatpush1.msra.mxu0 %v58
    %60 = vmatprep.subr.mxu0 0.0
    %v61 = vand.u32 %v38, 4294901760
    %62 = vmatpush1.msra.mxu0 %v61
    %63 = vmatprep.subr.mxu0 0.0
    %v64 = vand.u32 %v39, 4294901760
    %65 = vmatpush1.msra.mxu0 %v64
    %66 = vmatprep.subr.mxu0 0.0
    %v67 = vand.u32 %v40, 4294901760
    %68 = vmatpush1.msra.mxu0 %v67
    %69 = vmatprep.subr.mxu0 0.0
    %v70 = vand.u32 %v41, 4294901760
    %71 = vmatpush1.msra.mxu0 %v70
    %72 = vmatprep.subr.mxu0 0.0
    %v73 = vand.u32 %v42, 4294901760
    %74 = vmatpush1.msra.mxu0 %v73
    %75 = vmatprep.subr.mxu0 0.0
    %v76 = vand.u32 %v43, 4294901760
    %77 = vmatpush1.msra.mxu0 %v76
    %78 = vmatprep.subr.mxu0 0.0
    %v79 = vand.u32 %v44, 4294901760
    %80 = vmatpush1.msra.mxu0 %v79
    %81 = vmatprep.subr.mxu0 0.0
    %v82 = vand.u32 %v45, 4294901760
    %83 = vmatpush1.msra.mxu0 %v82
    %84 = vmatprep.subr.mxu0 0.0
    %v85 = vand.u32 %v46, 4294901760
    %86 = vmatpush1.msra.mxu0 %v85
    %87 = vmatprep.subr.mxu0 0.0
    %v88 = vand.u32 %v47, 4294901760
    %89 = vmatpush1.msra.mxu0 %v88
    %90 = vmatprep.subr.mxu0 0.0
    %v91 = vand.u32 %v48, 4294901760
    %92 = vmatpush1.msra.mxu0 %v91
    %93 = vmatprep.subr.mxu0 0.0
    %v94 = vand.u32 %v49, 4294901760
    %95 = vmatpush1.msra.mxu0 %v94
    %96 = vmatprep.subr.mxu0 0.0
    %v97 = vand.u32 %v50, 4294901760
    %98 = vmatpush1.msra.mxu0 %v97
    %99 = vmatprep.subr.mxu0 0.0
    %100 = vmatpush1.msra.mxu0 0.0
    %101 = vmatprep.subr.mxu0 0.0
    %102 = vmatpush1.msra.mxu0 0.0
    %103 = vmatprep.subr.mxu0 0.0
    %104 = vmatpush1.msra.mxu0 0.0
    %105 = vmatprep.subr.mxu0 0.0
    %106 = vmatpush1.msra.mxu0 0.0
    %107 = vmatprep.subr.mxu0 0.0
    %108 = vmatpush1.msra.mxu0 0.0
    %109 = vmatprep.subr.mxu0 0.0
    %110 = vmatpush1.msra.mxu0 0.0
    %111 = vmatprep.subr.mxu0 0.0
    %112 = vmatpush1.msra.mxu0 0.0
    %113 = vmatprep.subr.mxu0 0.0
    %114 = vmatpush1.msra.mxu0 0.0
    %115 = vmatprep.subr.mxu0 0.0
    %116 = vmatpush1.msra.mxu0 0.0
    %117 = vmatprep.subr.mxu0 0.0
    %118 = vmatpush1.msra.mxu0 0.0
    %119 = vmatprep.subr.mxu0 0.0
    %120 = vmatpush1.msra.mxu0 0.0
    %121 = vmatprep.subr.mxu0 0.0
    %122 = vmatpush1.msra.mxu0 0.0
    %123 = vmatprep.subr.mxu0 0.0
    %124 = vmatpush1.msra.mxu0 0.0
    %125 = vmatprep.subr.mxu0 0.0
    %126 = vmatpush1.msra.mxu0 0.0
    %127 = vmatprep.subr.mxu0 0.0
    %128 = vmatpush1.msra.mxu0 0.0
    %129 = vmatprep.subr.mxu0 0.0
    %130 = vmatpush1.msra.mxu0 0.0
    %131 = vmatprep.mubr.f32.mxu0 0.0
    %v132 = vand.u32 %v34, 4294901760
    %v133 = vsub.f32 %v34, %v132
    %v134 = vand.u32 %v133, 4294901760
    %v135 = vsub.f32 %v133, %v134
    %v136 = vand.u32 %v135, 4294901760
    %137 = vmatmul.mubr.f32.gmra.mrb[0].mxu0 %v136
    %v138 = vpop.f32.mrb[0].mxu0
    %v139 = vadd.f32 0.0, %v138
    %v140 = vpop.f32.mrb[0].mxu0
    %141 = vdwg.mxu0
    %142 = vmatprep.subr.mxu0 0.0
    %v143 = vand.u32 %v35, 4294901760
    %v144 = vsub.f32 %v35, %v143
    %v145 = vand.u32 %v144, 4294901760
    %v146 = vsub.f32 %v144, %v145
    %v147 = vand.u32 %v146, 4294901760
    %148 = vmatpush1.msra.mxu0 %v147
    %149 = vmatprep.subr.mxu0 0.0
    %v150 = vand.u32 %v36, 4294901760
    %v151 = vsub.f32 %v36, %v150
    %v152 = vand.u32 %v151, 4294901760
    %v153 = vsub.f32 %v151, %v152
    %v154 = vand.u32 %v153, 4294901760
    %155 = vmatpush1.msra.mxu0 %v154
    %156 = vmatprep.subr.mxu0 0.0
    %v157 = vand.u32 %v37, 4294901760
    %v158 = vsub.f32 %v37, %v157
    %v159 = vand.u32 %v158, 4294901760
    %v160 = vsub.f32 %v158, %v159
    %v161 = vand.u32 %v160, 4294901760
    %162 = vmatpush1.msra.mxu0 %v161
    %163 = vmatprep.subr.mxu0 0.0
    %v164 = vand.u32 %v38, 4294901760
    %v165 = vsub.f32 %v38, %v164
    %v166 = vand.u32 %v165, 4294901760
    %v167 = vsub.f32 %v165, %v166
    %v168 = vand.u32 %v167, 4294901760
    %169 = vmatpush1.msra.mxu0 %v168
    %170 = vmatprep.subr.mxu0 0.0
    %v171 = vand.u32 %v39, 4294901760
    %v172 = vsub.f32 %v39, %v171
    %v173 = vand.u32 %v172, 4294901760
    %v174 = vsub.f32 %v172, %v173
    %v175 = vand.u32 %v174, 4294901760
    %176 = vmatpush1.msra.mxu0 %v175
    %177 = vmatprep.subr.mxu0 0.0
    %v178 = vand.u32 %v40, 4294901760
    %v179 = vsub.f32 %v40, %v178
    %v180 = vand.u32 %v179, 4294901760
    %v181 = vsub.f32 %v179, %v180
    %v182 = vand.u32 %v181, 4294901760
    %183 = vmatpush1.msra.mxu0 %v182
    %184 = vmatprep.subr.mxu0 0.0
    %v185 = vand.u32 %v41, 4294901760
    %v186 = vsub.f32 %v41, %v185
    %v187 = vand.u32 %v186, 4294901760
    %v188 = vsub.f32 %v186, %v187
    %v189 = vand.u32 %v188, 4294901760
    %190 = vmatpush1.msra.mxu0 %v189
    %191 = vmatprep.subr.mxu0 0.0
    %v192 = vand.u32 %v42, 4294901760
    %v193 = vsub.f32 %v42, %v192
    %v194 = vand.u32 %v193, 4294901760
    %v195 = vsub.f32 %v193, %v194
    %v196 = vand.u32 %v195, 4294901760
    %197 = vmatpush1.msra.mxu0 %v196
    %198 = vmatprep.subr.mxu0 0.0
    %v199 = vand.u32 %v43, 4294901760
    %v200 = vsub.f32 %v43, %v199
    %v201 = vand.u32 %v200, 4294901760
    %v202 = vsub.f32 %v200, %v201
    %v203 = vand.u32 %v202, 4294901760
    %204 = vmatpush1.msra.mxu0 %v203
    %205 = vmatprep.subr.mxu0 0.0
    %v206 = vand.u32 %v44, 4294901760
    %v207 = vsub.f32 %v44, %v206
    %v208 = vand.u32 %v207, 4294901760
    %v209 = vsub.f32 %v207, %v208
    %v210 = vand.u32 %v209, 4294901760
    %211 = vmatpush1.msra.mxu0 %v210
    %212 = vmatprep.subr.mxu0 0.0
    %v213 = vand.u32 %v45, 4294901760
    %v214 = vsub.f32 %v45, %v213
    %v215 = vand.u32 %v214, 4294901760
    %v216 = vsub.f32 %v214, %v215
    %v217 = vand.u32 %v216, 4294901760
    %218 = vmatpush1.msra.mxu0 %v217
    %219 = vmatprep.subr.mxu0 0.0
    %v220 = vand.u32 %v46, 4294901760
    %v221 = vsub.f32 %v46, %v220
    %v222 = vand.u32 %v221, 4294901760
    %v223 = vsub.f32 %v221, %v222
    %v224 = vand.u32 %v223, 4294901760
    %225 = vmatpush1.msra.mxu0 %v224
    %226 = vmatprep.subr.mxu0 0.0
    %v227 = vand.u32 %v47, 4294901760
    %v228 = vsub.f32 %v47, %v227
    %v229 = vand.u32 %v228, 4294901760
    %v230 = vsub.f32 %v228, %v229
    %v231 = vand.u32 %v230, 4294901760
    %232 = vmatpush1.msra.mxu0 %v231
    %233 = vmatprep.subr.mxu0 0.0
    %v234 = vand.u32 %v48, 4294901760
    %v235 = vsub.f32 %v48, %v234
    %v236 = vand.u32 %v235, 4294901760
    %v237 = vsub.f32 %v235, %v236
    %v238 = vand.u32 %v237, 4294901760
    %239 = vmatpush1.msra.mxu0 %v238
    %240 = vmatprep.subr.mxu0 0.0
    %v241 = vand.u32 %v49, 4294901760
    %v242 = vsub.f32 %v49, %v241
    %v243 = vand.u32 %v242, 4294901760
    %v244 = vsub.f32 %v242, %v243
    %v245 = vand.u32 %v244, 4294901760
    %246 = vmatpush1.msra.mxu0 %v245
    %247 = vmatprep.subr.mxu0 0.0
    %v248 = vand.u32 %v50, 4294901760
    %v249 = vsub.f32 %v50, %v248
    %v250 = vand.u32 %v249, 4294901760
    %v251 = vsub.f32 %v249, %v250
    %v252 = vand.u32 %v251, 4294901760
    %253 = vmatpush1.msra.mxu0 %v252
    %254 = vmatprep.subr.mxu0 0.0
    %255 = vmatpush1.msra.mxu0 0.0
    %256 = vmatprep.subr.mxu0 0.0
    %257 = vmatpush1.msra.mxu0 0.0
    %258 = vmatprep.subr.mxu0 0.0
    %259 = vmatpush1.msra.mxu0 0.0
    %260 = vmatprep.subr.mxu0 0.0
    %261 = vmatpush1.msra.mxu0 0.0
    %262 = vmatprep.subr.mxu0 0.0
    %263 = vmatpush1.msra.mxu0 0.0
    %264 = vmatprep.subr.mxu0 0.0
    %265 = vmatpush1.msra.mxu0 0.0
    %266 = vmatprep.subr.mxu0 0.0
    %267 = vmatpush1.msra.mxu0 0.0
    %268 = vmatprep.subr.mxu0 0.0
    %269 = vmatpush1.msra.mxu0 0.0
    %270 = vmatprep.subr.mxu0 0.0
    %271 = vmatpush1.msra.mxu0 0.0
    %272 = vmatprep.subr.mxu0 0.0
    %273 = vmatpush1.msra.mxu0 0.0
    %274 = vmatprep.subr.mxu0 0.0
    %275 = vmatpush1.msra.mxu0 0.0
    %276 = vmatprep.subr.mxu0 0.0
    %277 = vmatpush1.msra.mxu0 0.0
    %278 = vmatprep.subr.mxu0 0.0
    %279 = vmatpush1.msra.mxu0 0.0
    %280 = vmatprep.subr.mxu0 0.0
    %281 = vmatpush1.msra.mxu0 0.0
    %282 = vmatprep.subr.mxu0 0.0
    %283 = vmatpush1.msra.mxu0 0.0
    %284 = vmatprep.subr.mxu0 0.0
    %285 = vmatpush1.msra.mxu0 0.0
    %286 = vmatprep.mubr.f32.mxu0 0.0
    %v287 = vand.u32 %v34, 4294901760
    %288 = vmatmul.mubr.f32.gmra.mrb[0].mxu0 %v287
    %v289 = vpop.f32.mrb[0].mxu0
    %v290 = vadd.f32 %v139, %v289
    %v291 = vpop.f32.mrb[0].mxu0
    %292 = vdwg.mxu0
    %293 = vmatprep.subr.mxu0 0.0
    %v294 = vand.u32 %v35, 4294901760
    %v295 = vsub.f32 %v35, %v294
    %296 = vmatpush1.msra.mxu0 %v295
    %297 = vmatprep.subr.mxu0 0.0
    %v298 = vand.u32 %v36, 4294901760
    %v299 = vsub.f32 %v36, %v298
    %300 = vmatpush1.msra.mxu0 %v299
    %301 = vmatprep.subr.mxu0 0.0
    %v302 = vand.u32 %v37, 4294901760
    %v303 = vsub.f32 %v37, %v302
    %304 = vmatpush1.msra.mxu0 %v303
    %305 = vmatprep.subr.mxu0 0.0
    %v306 = vand.u32 %v38, 4294901760
    %v307 = vsub.f32 %v38, %v306
    %308 = vmatpush1.msra.mxu0 %v307
    %309 = vmatprep.subr.mxu0 0.0
    %v310 = vand.u32 %v39, 4294901760
    %v311 = vsub.f32 %v39, %v310
    %312 = vmatpush1.msra.mxu0 %v311
    %313 = vmatprep.subr.mxu0 0.0
    %v314 = vand.u32 %v40, 4294901760
    %v315 = vsub.f32 %v40, %v314
    %316 = vmatpush1.msra.mxu0 %v315
    %317 = vmatprep.subr.mxu0 0.0
    %v318 = vand.u32 %v41, 4294901760
    %v319 = vsub.f32 %v41, %v318
    %320 = vmatpush1.msra.mxu0 %v319
    %321 = vmatprep.subr.mxu0 0.0
    %v322 = vand.u32 %v42, 4294901760
    %v323 = vsub.f32 %v42, %v322
    %324 = vmatpush1.msra.mxu0 %v323
    %325 = vmatprep.subr.mxu0 0.0
    %v326 = vand.u32 %v43, 4294901760
    %v327 = vsub.f32 %v43, %v326
    %328 = vmatpush1.msra.mxu0 %v327
    %329 = vmatprep.subr.mxu0 0.0
    %v330 = vand.u32 %v44, 4294901760
    %v331 = vsub.f32 %v44, %v330
    %332 = vmatpush1.msra.mxu0 %v331
    %333 = vmatprep.subr.mxu0 0.0
    %v334 = vand.u32 %v45, 4294901760
    %v335 = vsub.f32 %v45, %v334
    %336 = vmatpush1.msra.mxu0 %v335
    %337 = vmatprep.subr.mxu0 0.0
    %v338 = vand.u32 %v46, 4294901760
    %v339 = vsub.f32 %v46, %v338
    %340 = vmatpush1.msra.mxu0 %v339
    %341 = vmatprep.subr.mxu0 0.0
    %v342 = vand.u32 %v47, 4294901760
    %v343 = vsub.f32 %v47, %v342
    %344 = vmatpush1.msra.mxu0 %v343
    %345 = vmatprep.subr.mxu0 0.0
    %v346 = vand.u32 %v48, 4294901760
    %v347 = vsub.f32 %v48, %v346
    %348 = vmatpush1.msra.mxu0 %v347
    %349 = vmatprep.subr.mxu0 0.0
    %v350 = vand.u32 %v49, 4294901760
    %v351 = vsub.f32 %v49, %v350
    %352 = vmatpush1.msra.mxu0 %v351
    %353 = vmatprep.subr.mxu0 0.0
    %v354 = vand.u32 %v50, 4294901760
    %v355 = vsub.f32 %v50, %v354
    %356 = vmatpush1.msra.mxu0 %v355
    %357 = vmatprep.subr.mxu0 0.0
    %358 = vmatpush1.msra.mxu0 0.0
    %359 = vmatprep.subr.mxu0 0.0
    %360 = vmatpush1.msra.mxu0 0.0
    %361 = vmatprep.subr.mxu0 0.0
    %362 = vmatpush1.msra.mxu0 0.0
    %363 = vmatprep.subr.mxu0 0.0
    %364 = vmatpush1.msra.mxu0 0.0
    %365 = vmatprep.subr.mxu0 0.0
    %366 = vmatpush1.msra.mxu0 0.0
    %367 = vmatprep.subr.mxu0 0.0
    %368 = vmatpush1.msra.mxu0 0.0
    %369 = vmatprep.subr.mxu0 0.0
    %370 = vmatpush1.msra.mxu0 0.0
    %371 = vmatprep.subr.mxu0 0.0
    %372 = vmatpush1.msra.mxu0 0.0
    %373 = vmatprep.subr.mxu0 0.0
    %374 = vmatpush1.msra.mxu0 0.0
    %375 = vmatprep.subr.mxu0 0.0
    %376 = vmatpush1.msra.mxu0 0.0
    %377 = vmatprep.subr.mxu0 0.0
    %378 = vmatpush1.msra.mxu0 0.0
    %379 = vmatprep.subr.mxu0 0.0
    %380 = vmatpush1.msra.mxu0 0.0
    %381 = vmatprep.subr.mxu0 0.0
    %382 = vmatpush1.msra.mxu0 0.0
    %383 = vmatprep.subr.mxu0 0.0
    %384 = vmatpush1.msra.mxu0 0.0
    %385 = vmatprep.subr.mxu0 0.0
    %386 = vmatpush1.msra.mxu0 0.0
    %387 = vmatprep.subr.mxu0 0.0
    %388 = vmatpush1.msra.mxu0 0.0
    %389 = vmatprep.mubr.f32.mxu0 0.0
    %v390 = vand.u32 %v34, 4294901760
    %v391 = vsub.f32 %v34, %v390
    %392 = vmatmul.mubr.f32.gmra.mrb[0].mxu0 %v391
    %v393 = vpop.f32.mrb[0].mxu0
    %v394 = vadd.f32 %v290, %v393
    %v395 = vpop.f32.mrb[0].mxu0
    %396 = vdwg.mxu0
    %397 = vmatprep.subr.mxu0 0.0
    %v398 = vand.u32 %v35, 4294901760
    %399 = vmatpush1.msra.mxu0 %v398
    %400 = vmatprep.subr.mxu0 0.0
    %v401 = vand.u32 %v36, 4294901760
    %402 = vmatpush1.msra.mxu0 %v401
    %403 = vmatprep.subr.mxu0 0.0
    %v404 = vand.u32 %v37, 4294901760
    %405 = vmatpush1.msra.mxu0 %v404
    %406 = vmatprep.subr.mxu0 0.0
    %v407 = vand.u32 %v38, 4294901760
    %408 = vmatpush1.msra.mxu0 %v407
    %409 = vmatprep.subr.mxu0 0.0
    %v410 = vand.u32 %v39, 4294901760
    %411 = vmatpush1.msra.mxu0 %v410
    %412 = vmatprep.subr.mxu0 0.0
    %v413 = vand.u32 %v40, 4294901760
    %414 = vmatpush1.msra.mxu0 %v413
    %415 = vmatprep.subr.mxu0 0.0
    %v416 = vand.u32 %v41, 4294901760
    %417 = vmatpush1.msra.mxu0 %v416
    %418 = vmatprep.subr.mxu0 0.0
    %v419 = vand.u32 %v42, 4294901760
    %420 = vmatpush1.msra.mxu0 %v419
    %421 = vmatprep.subr.mxu0 0.0
    %v422 = vand.u32 %v43, 4294901760
    %423 = vmatpush1.msra.mxu0 %v422
    %424 = vmatprep.subr.mxu0 0.0
    %v425 = vand.u32 %v44, 4294901760
    %426 = vmatpush1.msra.mxu0 %v425
    %427 = vmatprep.subr.mxu0 0.0
    %v428 = vand.u32 %v45, 4294901760
    %429 = vmatpush1.msra.mxu0 %v428
    %430 = vmatprep.subr.mxu0 0.0
    %v431 = vand.u32 %v46, 4294901760
    %432 = vmatpush1.msra.mxu0 %v431
    %433 = vmatprep.subr.mxu0 0.0
    %v434 = vand.u32 %v47, 4294901760
    %435 = vmatpush1.msra.mxu0 %v434
    %436 = vmatprep.subr.mxu0 0.0
    %v437 = vand.u32 %v48, 4294901760
    %438 = vmatpush1.msra.mxu0 %v437
    %439 = vmatprep.subr.mxu0 0.0
    %v440 = vand.u32 %v49, 4294901760
    %441 = vmatpush1.msra.mxu0 %v440
    %442 = vmatprep.subr.mxu0 0.0
    %v443 = vand.u32 %v50, 4294901760
    %444 = vmatpush1.msra.mxu0 %v443
    %445 = vmatprep.subr.mxu0 0.0
    %446 = vmatpush1.msra.mxu0 0.0
    %447 = vmatprep.subr.mxu0 0.0
    %448 = vmatpush1.msra.mxu0 0.0
    %449 = vmatprep.subr.mxu0 0.0
    %450 = vmatpush1.msra.mxu0 0.0
    %451 = vmatprep.subr.mxu0 0.0
    %452 = vmatpush1.msra.mxu0 0.0
    %453 = vmatprep.subr.mxu0 0.0
    %454 = vmatpush1.msra.mxu0 0.0
    %455 = vmatprep.subr.mxu0 0.0
    %456 = vmatpush1.msra.mxu0 0.0
    %457 = vmatprep.subr.mxu0 0.0
    %458 = vmatpush1.msra.mxu0 0.0
    %459 = vmatprep.subr.mxu0 0.0
    %460 = vmatpush1.msra.mxu0 0.0
    %461 = vmatprep.subr.mxu0 0.0
    %462 = vmatpush1.msra.mxu0 0.0
    %463 = vmatprep.subr.mxu0 0.0
    %464 = vmatpush1.msra.mxu0 0.0
    %465 = vmatprep.subr.mxu0 0.0
    %466 = vmatpush1.msra.mxu0 0.0
    %467 = vmatprep.subr.mxu0 0.0
    %468 = vmatpush1.msra.mxu0 0.0
    %469 = vmatprep.subr.mxu0 0.0
    %470 = vmatpush1.msra.mxu0 0.0
    %471 = vmatprep.subr.mxu0 0.0
    %472 = vmatpush1.msra.mxu0 0.0
    %473 = vmatprep.subr.mxu0 0.0
    %474 = vmatpush1.msra.mxu0 0.0
    %475 = vmatprep.subr.mxu0 0.0
    %476 = vmatpush1.msra.mxu0 0.0
    %477 = vmatprep.mubr.f32.mxu0 0.0
    %v478 = vand.u32 %v34, 4294901760
    %v479 = vsub.f32 %v34, %v478
    %v480 = vand.u32 %v479, 4294901760
    %481 = vmatmul.mubr.f32.gmra.mrb[0].mxu0 %v480
    %v482 = vpop.f32.mrb[0].mxu0
    %v483 = vadd.f32 %v394, %v482
    %v484 = vpop.f32.mrb[0].mxu0
    %485 = vdwg.mxu0
    %486 = vmatprep.subr.mxu0 0.0
    %v487 = vand.u32 %v35, 4294901760
    %v488 = vsub.f32 %v35, %v487
    %v489 = vand.u32 %v488, 4294901760
    %490 = vmatpush1.msra.mxu0 %v489
    %491 = vmatprep.subr.mxu0 0.0
    %v492 = vand.u32 %v36, 4294901760
    %v493 = vsub.f32 %v36, %v492
    %v494 = vand.u32 %v493, 4294901760
    %495 = vmatpush1.msra.mxu0 %v494
    %496 = vmatprep.subr.mxu0 0.0
    %v497 = vand.u32 %v37, 4294901760
    %v498 = vsub.f32 %v37, %v497
    %v499 = vand.u32 %v498, 4294901760
    %500 = vmatpush1.msra.mxu0 %v499
    %501 = vmatprep.subr.mxu0 0.0
    %v502 = vand.u32 %v38, 4294901760
    %v503 = vsub.f32 %v38, %v502
    %v504 = vand.u32 %v503, 4294901760
    %505 = vmatpush1.msra.mxu0 %v504
    %506 = vmatprep.subr.mxu0 0.0
    %v507 = vand.u32 %v39, 4294901760
    %v508 = vsub.f32 %v39, %v507
    %v509 = vand.u32 %v508, 4294901760
    %510 = vmatpush1.msra.mxu0 %v509
    %511 = vmatprep.subr.mxu0 0.0
    %v512 = vand.u32 %v40, 4294901760
    %v513 = vsub.f32 %v40, %v512
    %v514 = vand.u32 %v513, 4294901760
    %515 = vmatpush1.msra.mxu0 %v514
    %516 = vmatprep.subr.mxu0 0.0
    %v517 = vand.u32 %v41, 4294901760
    %v518 = vsub.f32 %v41, %v517
    %v519 = vand.u32 %v518, 4294901760
    %520 = vmatpush1.msra.mxu0 %v519
    %521 = vmatprep.subr.mxu0 0.0
    %v522 = vand.u32 %v42, 4294901760
    %v523 = vsub.f32 %v42, %v522
    %v524 = vand.u32 %v523, 4294901760
    %525 = vmatpush1.msra.mxu0 %v524
    %526 = vmatprep.subr.mxu0 0.0
    %v527 = vand.u32 %v43, 4294901760
    %v528 = vsub.f32 %v43, %v527
    %v529 = vand.u32 %v528, 4294901760
    %530 = vmatpush1.msra.mxu0 %v529
    %531 = vmatprep.subr.mxu0 0.0
    %v532 = vand.u32 %v44, 4294901760
    %v533 = vsub.f32 %v44, %v532
    %v534 = vand.u32 %v533, 4294901760
    %535 = vmatpush1.msra.mxu0 %v534
    %536 = vmatprep.subr.mxu0 0.0
    %v537 = vand.u32 %v45, 4294901760
    %v538 = vsub.f32 %v45, %v537
    %v539 = vand.u32 %v538, 4294901760
    %540 = vmatpush1.msra.mxu0 %v539
    %541 = vmatprep.subr.mxu0 0.0
    %v542 = vand.u32 %v46, 4294901760
    %v543 = vsub.f32 %v46, %v542
    %v544 = vand.u32 %v543, 4294901760
    %545 = vmatpush1.msra.mxu0 %v544
    %546 = vmatprep.subr.mxu0 0.0
    %v547 = vand.u32 %v47, 4294901760
    %v548 = vsub.f32 %v47, %v547
    %v549 = vand.u32 %v548, 4294901760
    %550 = vmatpush1.msra.mxu0 %v549
    %551 = vmatprep.subr.mxu0 0.0
    %v552 = vand.u32 %v48, 4294901760
    %v553 = vsub.f32 %v48, %v552
    %v554 = vand.u32 %v553, 4294901760
    %555 = vmatpush1.msra.mxu0 %v554
    %556 = vmatprep.subr.mxu0 0.0
    %v557 = vand.u32 %v49, 4294901760
    %v558 = vsub.f32 %v49, %v557
    %v559 = vand.u32 %v558, 4294901760
    %560 = vmatpush1.msra.mxu0 %v559
    %561 = vmatprep.subr.mxu0 0.0
    %v562 = vand.u32 %v50, 4294901760
    %v563 = vsub.f32 %v50, %v562
    %v564 = vand.u32 %v563, 4294901760
    %565 = vmatpush1.msra.mxu0 %v564
    %566 = vmatprep.subr.mxu0 0.0
    %567 = vmatpush1.msra.mxu0 0.0
    %568 = vmatprep.subr.mxu0 0.0
    %569 = vmatpush1.msra.mxu0 0.0
    %570 = vmatprep.subr.mxu0 0.0
    %571 = vmatpush1.msra.mxu0 0.0
    %572 = vmatprep.subr.mxu0 0.0
    %573 = vmatpush1.msra.mxu0 0.0
    %574 = vmatprep.subr.mxu0 0.0
    %575 = vmatpush1.msra.mxu0 0.0
    %576 = vmatprep.subr.mxu0 0.0
    %577 = vmatpush1.msra.mxu0 0.0
    %578 = vmatprep.subr.mxu0 0.0
    %579 = vmatpush1.msra.mxu0 0.0
    %580 = vmatprep.subr.mxu0 0.0
    %581 = vmatpush1.msra.mxu0 0.0
    %582 = vmatprep.subr.mxu0 0.0
    %583 = vmatpush1.msra.mxu0 0.0
    %584 = vmatprep.subr.mxu0 0.0
    %585 = vmatpush1.msra.mxu0 0.0
    %586 = vmatprep.subr.mxu0 0.0
    %587 = vmatpush1.msra.mxu0 0.0
    %588 = vmatprep.subr.mxu0 0.0
    %589 = vmatpush1.msra.mxu0 0.0
    %590 = vmatprep.subr.mxu0 0.0
    %591 = vmatpush1.msra.mxu0 0.0
    %592 = vmatprep.subr.mxu0 0.0
    %593 = vmatpush1.msra.mxu0 0.0
    %594 = vmatprep.subr.mxu0 0.0
    %595 = vmatpush1.msra.mxu0 0.0
    %596 = vmatprep.subr.mxu0 0.0
    %597 = vmatpush1.msra.mxu0 0.0
    %598 = vmatprep.mubr.f32.mxu0 0.0
    %v599 = vand.u32 %v34, 4294901760
    %600 = vmatmul.mubr.f32.gmra.mrb[0].mxu0 %v599
    %v601 = vpop.f32.mrb[0].mxu0
    %v602 = vadd.f32 %v483, %v601
    %v603 = vpop.f32.mrb[0].mxu0
    %604 = vdwg.mxu0
    %605 = vmatprep.subr.mxu0 0.0
    %v606 = vand.u32 %v35, 4294901760
    %607 = vmatpush1.msra.mxu0 %v606
    %608 = vmatprep.subr.mxu0 0.0
    %v609 = vand.u32 %v36, 4294901760
    %610 = vmatpush1.msra.mxu0 %v609
    %611 = vmatprep.subr.mxu0 0.0
    %v612 = vand.u32 %v37, 4294901760
    %613 = vmatpush1.msra.mxu0 %v612
    %614 = vmatprep.subr.mxu0 0.0
    %v615 = vand.u32 %v38, 4294901760
    %616 = vmatpush1.msra.mxu0 %v615
    %617 = vmatprep.subr.mxu0 0.0
    %v618 = vand.u32 %v39, 4294901760
    %619 = vmatpush1.msra.mxu0 %v618
    %620 = vmatprep.subr.mxu0 0.0
    %v621 = vand.u32 %v40, 4294901760
    %622 = vmatpush1.msra.mxu0 %v621
    %623 = vmatprep.subr.mxu0 0.0
    %v624 = vand.u32 %v41, 4294901760
    %625 = vmatpush1.msra.mxu0 %v624
    %626 = vmatprep.subr.mxu0 0.0
    %v627 = vand.u32 %v42, 4294901760
    %628 = vmatpush1.msra.mxu0 %v627
    %629 = vmatprep.subr.mxu0 0.0
    %v630 = vand.u32 %v43, 4294901760
    %631 = vmatpush1.msra.mxu0 %v630
    %632 = vmatprep.subr.mxu0 0.0
    %v633 = vand.u32 %v44, 4294901760
    %634 = vmatpush1.msra.mxu0 %v633
    %635 = vmatprep.subr.mxu0 0.0
    %v636 = vand.u32 %v45, 4294901760
    %637 = vmatpush1.msra.mxu0 %v636
    %638 = vmatprep.subr.mxu0 0.0
    %v639 = vand.u32 %v46, 4294901760
    %640 = vmatpush1.msra.mxu0 %v639
    %641 = vmatprep.subr.mxu0 0.0
    %v642 = vand.u32 %v47, 4294901760
    %643 = vmatpush1.msra.mxu0 %v642
    %644 = vmatprep.subr.mxu0 0.0
    %v645 = vand.u32 %v48, 4294901760
    %646 = vmatpush1.msra.mxu0 %v645
    %647 = vmatprep.subr.mxu0 0.0
    %v648 = vand.u32 %v49, 4294901760
    %649 = vmatpush1.msra.mxu0 %v648
    %650 = vmatprep.subr.mxu0 0.0
    %v651 = vand.u32 %v50, 4294901760
    %652 = vmatpush1.msra.mxu0 %v651
    %653 = vmatprep.subr.mxu0 0.0
    %654 = vmatpush1.msra.mxu0 0.0
    %655 = vmatprep.subr.mxu0 0.0
    %656 = vmatpush1.msra.mxu0 0.0
    %657 = vmatprep.subr.mxu0 0.0
    %658 = vmatpush1.msra.mxu0 0.0
    %659 = vmatprep.subr.mxu0 0.0
    %660 = vmatpush1.msra.mxu0 0.0
    %661 = vmatprep.subr.mxu0 0.0
    %662 = vmatpush1.msra.mxu0 0.0
    %663 = vmatprep.subr.mxu0 0.0
    %664 = vmatpush1.msra.mxu0 0.0
    %665 = vmatprep.subr.mxu0 0.0
    %666 = vmatpush1.msra.mxu0 0.0
    %667 = vmatprep.subr.mxu0 0.0
    %668 = vmatpush1.msra.mxu0 0.0
    %669 = vmatprep.subr.mxu0 0.0
    %670 = vmatpush1.msra.mxu0 0.0
    %671 = vmatprep.subr.mxu0 0.0
    %672 = vmatpush1.msra.mxu0 0.0
    %673 = vmatprep.subr.mxu0 0.0
    %674 = vmatpush1.msra.mxu0 0.0
    %675 = vmatprep.subr.mxu0 0.0
    %676 = vmatpush1.msra.mxu0 0.0
    %677 = vmatprep.subr.mxu0 0.0
    %678 = vmatpush1.msra.mxu0 0.0
    %679 = vmatprep.subr.mxu0 0.0
    %680 = vmatpush1.msra.mxu0 0.0
    %681 = vmatprep.subr.mxu0 0.0
    %682 = vmatpush1.msra.mxu0 0.0
    %683 = vmatprep.subr.mxu0 0.0
    %684 = vmatpush1.msra.mxu0 0.0
    %685 = vmatprep.mubr.f32.mxu0 0.0
    %v686 = vand.u32 %v34, 4294901760
    %687 = vmatmul.mubr.f32.gmra.mrb[0].mxu0 %v686
    %v688 = vpop.f32.mrb[0].mxu0
    %v689 = vadd.f32 %v602, %v688
    %v690 = vpop.f32.mrb[0].mxu0
    %691 = vdwg.mxu0
    %v692 = vadd.f32 %v689, 1e-06
    %v693 = vrcp.pop %v692
    %s694 = sld [smem:[#allocation2]]
    %s695 = sld [smem:[#allocation3]]
    %v696 = vsub.f32 %v34, %v689
    %v697 = vstv %s694
    %v698 = vmul.f32 %v697, %v696
    %v699 = vmul.f32 %v698, %v693
    %v700 = vstv %s695
    %v701 = vadd.f32 %v699, %v700
    %702 = vst [vmem:[#allocation7] sm:$0xf] %v701
    // Predicated region
    $region22: #{tpu_custom_call.1} parent=1 // pred_check
      _
    $region23: #{tpu_custom_call.1} parent=1 // pred_check_branch
      %704 = sbr.rel (0) target = $region25
    $region24: #{tpu_custom_call.1} parent=1 // pred_region
      %s706 = ssub.s32 64, 64
      %707 = vsyncadd [#allocation6], %s706
      %s709 = sshll.u32 [#allocation7], 4
      %s710 = int_to_ptr.vmem [resolvable:$true] %s709
      %712 = dma.vmem_to_hbm [thread:$0]  %s710, 64, %s4, [#allocation6]
    $region25: #{tpu_custom_call.1} parent=1 // pred_fallthru
      _
    // Predicated region
    $region26: #{tpu_custom_call.1} parent=1 // pred_check
      _
    $region27: #{tpu_custom_call.1} parent=1 // pred_check_branch
      %714 = sbr.rel (0) target = $region29
    $region28: #{tpu_custom_call.1} parent=1 // pred_region
      %715 = dma.done [#allocation6], 64
    $region29: #{tpu_custom_call.1} parent=1 // pred_fallthru
      _
    %716 = vsyncpa [#allocation5], 1
    %717 = vsyncpa [#allocation6], 1

</llo_original>
